<compile_context>
chip_gen: v5e
topology: v5e:2x2
jax: 0.10.0
libtpu: 0.0.40
codegen_flags: <defaults>
</compile_context>

<pallas_src>
import functools

import numpy as np
import jax
import jax.numpy as jnp
from jax.experimental import pallas as pl
from jax.experimental.pallas import tpu as pltpu


# ---------------------------------------------------------------------------
# host-side (numpy) constant preparation
# ---------------------------------------------------------------------------
def _bilinear_matrix_np(out_size: int, in_size: int) -> np.ndarray:
    """PyTorch F.interpolate(mode='bilinear', align_corners=False) as a matrix."""
    scale = in_size / out_size
    dst = np.arange(out_size, dtype=np.float64)
    src = (dst + 0.5) * scale - 0.5
    src = np.maximum(src, 0.0)                      # PyTorch clamps negative src
    p0 = np.minimum(np.floor(src).astype(np.int64), in_size - 1)
    p1 = np.minimum(p0 + 1, in_size - 1)
    lam = src - p0
    m = np.zeros((out_size, in_size), np.float64)
    m[np.arange(out_size), p0] += 1.0 - lam
    m[np.arange(out_size), p1] += lam
    return m.astype(np.float32)                     # (out, in)


def _default_fold_batch() -> bool:
    """Fold batch onto lanes on single-TensorCore chips; keep grid=(N,) on v7x."""
    try:
        kind = jax.devices()[0].device_kind.lower()
    except Exception:
        return True
    return "v7" not in kind


# ---------------------------------------------------------------------------
# fused kernel: skip_conv + bilinear upsample (one kron matmul) + add + ReLU
#               + 3x3 blend conv (roll-based im2col, one K=9*Cm matmul)
# Works on (C, L) tiles where L is either Hs*Ws (per-batch grid) or N*Hs*Ws
# (batch folded onto lanes); the tap/mask math is identical in both cases.
# ---------------------------------------------------------------------------
def _fused_upsample_kernel(skip_ref, x_ref, w1_ref, b1_ref, kron_ref,
                           w2_ref, b2_ref, mask_ref, o_ref, *, KH, KW, Ws):
    f32 = jnp.float32

    # ---- skip_conv: ReLU then 1x1 conv  -> (Cm, L) ---------------------------
    skip = jnp.maximum(skip_ref[...], 0.0)                                    # (Cs, L)
    s = jnp.dot(w1_ref[...], skip, preferred_element_type=f32) + b1_ref[...]  # (Cm, L)

    # ---- bilinear upsample: ONE matmul against precomputed kron(Ah, Aw).T ----
    up = jnp.dot(x_ref[...], kron_ref[...], preferred_element_type=f32)       # (Cm, L)

    # ---- residual add + ReLU --------------------------------------------------
    z = jnp.maximum(up + s, 0.0)                                              # (Cm, L)
    L = z.shape[-1]

    # ---- blend_conv (KHxKW, same padding) as ONE K = KH*KW*Cm matmul ----------
    # im2col taps are lane rotations of z (XLU slot, stays in vregs); the
    # halo masks zero every lane where the rotation wraps or leaves the image.
    mask = mask_ref[...]                                                      # (KH*KW, L)
    cols = []
    t = 0
    for kh in range(KH):
        for kw in range(KW):
            d = (kh - KH // 2) * Ws + (kw - KW // 2)
            if d == 0:
                cols.append(z)                       # centre tap: always valid
            else:
                zt = pltpu.roll(z, shift=(-d) % L, axis=1)                    # (Cm, L)
                cols.append(zt * mask[t:t + 1, :])
            t += 1
    stacked = jnp.concatenate(cols, axis=0)                                   # (KH*KW*Cm, L)
    out = jnp.dot(w2_ref[...], stacked, preferred_element_type=f32) + b2_ref[...]
    o_ref[...] = out                                                          # (Co, L)


# ---------------------------------------------------------------------------
# builder: numpy precompute of constants + jitted forward(skip, x)
# ---------------------------------------------------------------------------
def make_upsample_fn(w1, b1, w2, b2, skip_hw, x_hw, fold_batch=None):
    """w1: (Cm, Cs, 1, 1), b1: (Cm,), w2: (Co, Cm, KH, KW), b2: (Co,) as numpy."""
    w1 = np.asarray(w1, np.float32)
    b1 = np.asarray(b1, np.float32)
    w2 = np.asarray(w2, np.float32)
    b2 = np.asarray(b2, np.float32)
    Cm, Cs = w1.shape[0], w1.shape[1]
    Co, _, KH, KW = w2.shape
    assert KH % 2 == 1 and KW % 2 == 1, "blend_conv assumes odd kernel (same pad)"
    Hs, Ws = skip_hw
    Hx, Wx = x_hw
    S = Hs * Ws
    if fold_batch is None:
        fold_batch = _default_fold_batch()

    # constants (host-side numpy, no XLA glue ops in the hot path)
    ah = _bilinear_matrix_np(Hs, Hx)                               # (Hs, Hx)
    aw = _bilinear_matrix_np(Ws, Wx)                               # (Ws, Wx)
    kron = np.ascontiguousarray(np.kron(ah, aw).T)                 # (Hx*Wx, S)
    w1m = np.ascontiguousarray(w1[:, :, 0, 0])                     # (Cm, Cs)
    b1c = b1.reshape(Cm, 1)
    w2s = np.transpose(w2, (2, 3, 0, 1)).reshape(KH * KW, Co, Cm)
    w2s = np.ascontiguousarray(np.transpose(w2s, (1, 0, 2))).reshape(Co, KH * KW * Cm)
    b2c = b2.reshape(Co, 1)

    hh, ww = np.meshgrid(np.arange(Hs), np.arange(Ws), indexing="ij")
    masks = np.zeros((KH * KW, S), np.float32)                     # flat 2D (no size-1 dim)
    t = 0
    for kh in range(KH):
        for kw in range(KW):
            dh, dw = kh - KH // 2, kw - KW // 2
            ok = (hh + dh >= 0) & (hh + dh < Hs) & (ww + dw >= 0) & (ww + dw < Ws)
            masks[t] = ok.reshape(-1).astype(np.float32)
            t += 1

    kernel = functools.partial(_fused_upsample_kernel, KH=KH, KW=KW, Ws=Ws)

    def forward(skip, x):
        N = skip.shape[0]
        assert skip.shape[1:] == (Cs, Hs, Ws), skip.shape
        assert x.shape[1:] == (Cm, Hx, Wx), x.shape

        flops = 2 * N * S * (Cm * Cs + Cm * Hx * Wx + Co * KH * KW * Cm)

        if fold_batch:
            # single-TC chips: fold batch onto lanes -> one grid step, 512 lanes
            L = N * S
            skip_f = skip.reshape(N, Cs, S).transpose(1, 0, 2).reshape(Cs, L)
            x_f = x.reshape(N, Cm, Hx * Wx).transpose(1, 0, 2).reshape(Cm, N * Hx * Wx)
            kron_c = np.kron(np.eye(N, dtype=np.float32), kron)   # block-diag (N*Hx*Wx, L)
            mask_c = np.tile(masks, (1, N))                       # (KH*KW, L)
            consts = tuple(jnp.asarray(a) for a in (w1m, b1c, kron_c, w2s, b2c, mask_c))
            bytes_accessed = 4 * (skip_f.size + x_f.size + Co * L
                                  + sum(int(np.prod(c.shape)) for c in consts))
            out = pl.pallas_call(
                kernel,
                out_shape=jax.ShapeDtypeStruct((Co, L), jnp.float32),
                grid=(1,),
                in_specs=[
                    pl.BlockSpec((Cs, L), lambda b: (0, 0)),
                    pl.BlockSpec((Cm, N * Hx * Wx), lambda b: (0, 0)),
                    pl.BlockSpec((Cm, Cs), lambda b: (0, 0)),
                    pl.BlockSpec((Cm, 1), lambda b: (0, 0)),
                    pl.BlockSpec((N * Hx * Wx, L), lambda b: (0, 0)),
                    pl.BlockSpec((Co, KH * KW * Cm), lambda b: (0, 0)),
                    pl.BlockSpec((Co, 1), lambda b: (0, 0)),
                    pl.BlockSpec((KH * KW, L), lambda b: (0, 0)),
                ],
                out_specs=pl.BlockSpec((Co, L), lambda b: (0, 0)),
                compiler_params=pltpu.CompilerParams(
                    dimension_semantics=("arbitrary",)),
                cost_estimate=pl.CostEstimate(
                    flops=flops, transcendentals=0, bytes_accessed=bytes_accessed),
            )(skip_f, x_f, *consts)
            return out.reshape(Co, N, Hs, Ws).transpose(1, 0, 2, 3)

        # v7x (2 TCs/chip): one batch element per grid step, both cores busy.
        skip_f = skip.reshape(N, Cs, S)                            # free reshape
        x_f = x.reshape(N, Cm, Hx * Wx)                            # free reshape
        consts = tuple(jnp.asarray(a) for a in (w1m, b1c, kron, w2s, b2c, masks))
        bytes_accessed = 4 * (skip_f.size + x_f.size + N * Co * S
                              + sum(int(np.prod(c.shape)) for c in consts))
        out = pl.pallas_call(
            kernel,
            out_shape=jax.ShapeDtypeStruct((N, Co, S), jnp.float32),
            grid=(N,),
            in_specs=[
                pl.BlockSpec((None, Cs, S), lambda b: (b, 0, 0)),
                pl.BlockSpec((None, Cm, Hx * Wx), lambda b: (b, 0, 0)),
                pl.BlockSpec((Cm, Cs), lambda b: (0, 0)),
                pl.BlockSpec((Cm, 1), lambda b: (0, 0)),
                pl.BlockSpec((Hx * Wx, S), lambda b: (0, 0)),
                pl.BlockSpec((Co, KH * KW * Cm), lambda b: (0, 0)),
                pl.BlockSpec((Co, 1), lambda b: (0, 0)),
                pl.BlockSpec((KH * KW, S), lambda b: (0, 0)),
            ],
            out_specs=pl.BlockSpec((None, Co, S), lambda b: (b, 0, 0)),
            compiler_params=pltpu.CompilerParams(
                dimension_semantics=("parallel",)),
            cost_estimate=pl.CostEstimate(
                flops=flops, transcendentals=0, bytes_accessed=bytes_accessed),
        )(skip_f, x_f, *consts)
        return out.reshape(N, Co, Hs, Ws)                          # free reshape back

    return jax.jit(forward)


# ---------------------------------------------------------------------------
# pure-JAX reference (mirrors the PyTorch module semantics in NCHW)
# ---------------------------------------------------------------------------
def reference(skip, x, w1, b1, w2, b2):
    Hs, Ws = skip.shape[2], skip.shape[3]
    Hx, Wx = x.shape[2], x.shape[3]
    s = jax.nn.relu(skip)
    s = jax.lax.conv_general_dilated(
        s, w1, (1, 1), 'SAME', dimension_numbers=('NCHW', 'OIHW', 'NCHW'))
    s = s + b1[None, :, None, None]
    Ah = jnp.asarray(_bilinear_matrix_np(Hs, Hx))
    Aw = jnp.asarray(_bilinear_matrix_np(Ws, Wx))
    up = jnp.einsum('ip,ncpw->nciw', Ah, x)
    up = jnp.einsum('jq,nciq->ncij', Aw, up)
    z = jax.nn.relu(up + s)
    out = jax.lax.conv_general_dilated(
        z, w2, (1, 1), 'SAME', dimension_numbers=('NCHW', 'OIHW', 'NCHW'))
    return out + b2[None, :, None, None]


if __name__ == "__main__":
    # module config: _Upsample(num_maps_in=8, skip_maps_in=6, num_maps_out=8, k=3)
    N, Cs, Cm, Co = 2, 6, 8, 8
    Hs, Ws = 16, 16          # skip spatial size (upsample target)
    Hx, Wx = 8, 8            # low-resolution x spatial size

    key = jax.random.PRNGKey(0)
    k1, k2, k3, k4, k5, k6 = jax.random.split(key, 6)
    skip = jax.random.normal(k1, (N, Cs, Hs, Ws), dtype=jnp.float32)
    x = jax.random.normal(k2, (N, Cm, Hx, Wx), dtype=jnp.float32)
    w1 = 0.2 * jax.random.normal(k3, (Cm, Cs, 1, 1), dtype=jnp.float32)
    b1 = 0.1 * jax.random.normal(k4, (Cm,), dtype=jnp.float32)
    w2 = 0.2 * jax.random.normal(k5, (Co, Cm, 3, 3), dtype=jnp.float32)
    b2 = 0.1 * jax.random.normal(k6, (Co,), dtype=jnp.float32)

    fwd = make_upsample_fn(np.asarray(w1), np.asarray(b1),
                           np.asarray(w2), np.asarray(b2),
                           skip_hw=(Hs, Ws), x_hw=(Hx, Wx))
    out = jax.block_until_ready(fwd(skip, x))

    ref = reference(skip, x, w1, b1, w2, b2)
    assert out.shape == (N, Co, Hs, Ws), out.shape
    max_err = float(jnp.max(jnp.abs(out - ref)))
    assert jnp.allclose(out, ref, atol=1e-3, rtol=1e-3), max_err

    print("KERNEL_OK")
</pallas_src>

<mosaic_0001>
module attributes {stable_mosaic.version = 11 : i64} {
  func.func @_fused_upsample_kernel(%arg0: i32, %arg1: memref<6x512xf32, #tpu.memory_space<vmem>>, %arg2: memref<8x128xf32, #tpu.memory_space<vmem>>, %arg3: memref<8x6xf32, #tpu.memory_space<vmem>>, %arg4: memref<8x1xf32, #tpu.memory_space<vmem>>, %arg5: memref<128x512xf32, #tpu.memory_space<vmem>>, %arg6: memref<8x72xf32, #tpu.memory_space<vmem>>, %arg7: memref<8x1xf32, #tpu.memory_space<vmem>>, %arg8: memref<9x512xf32, #tpu.memory_space<vmem>>, %arg9: memref<8x512xf32, #tpu.memory_space<vmem>>) attributes {dimension_semantics = [#tpu.dimension_semantics<arbitrary>], iteration_bounds = array<i64: 1>, scalar_prefetch = 0 : i64, scratch_operands = 0 : i64, tpu.core_type = #tpu.core_type<tc>, window_params = [{pipeline_mode = #tpu.pipeline_mode<synchronous>, transform_indices = @transform_0, window_bounds = array<i64: 6, 512>}, {pipeline_mode = #tpu.pipeline_mode<synchronous>, transform_indices = @transform_1, window_bounds = array<i64: 8, 128>}, {pipeline_mode = #tpu.pipeline_mode<synchronous>, transform_indices = @transform_2, window_bounds = array<i64: 8, 6>}, {pipeline_mode = #tpu.pipeline_mode<synchronous>, transform_indices = @transform_3, window_bounds = array<i64: 8, 1>}, {pipeline_mode = #tpu.pipeline_mode<synchronous>, transform_indices = @transform_4, window_bounds = array<i64: 128, 512>}, {pipeline_mode = #tpu.pipeline_mode<synchronous>, transform_indices = @transform_5, window_bounds = array<i64: 8, 72>}, {pipeline_mode = #tpu.pipeline_mode<synchronous>, transform_indices = @transform_6, window_bounds = array<i64: 8, 1>}, {pipeline_mode = #tpu.pipeline_mode<synchronous>, transform_indices = @transform_7, window_bounds = array<i64: 9, 512>}, {pipeline_mode = #tpu.pipeline_mode<synchronous>, transform_indices = @transform_8, window_bounds = array<i64: 8, 512>}]} {
    %c0 = arith.constant 0 : index
    %c0_0 = arith.constant 0 : index
    %0 = vector.load %arg1[%c0, %c0_0] : memref<6x512xf32, #tpu.memory_space<vmem>>, vector<6x512xf32>
    %cst = arith.constant 0.000000e+00 : f32
    %1 = vector.broadcast %cst : f32 to vector<6x512xf32>
    %2 = arith.maximumf %0, %1 : vector<6x512xf32>
    %c0_1 = arith.constant 0 : index
    %c0_2 = arith.constant 0 : index
    %3 = vector.load %arg3[%c0_1, %c0_2] : memref<8x6xf32, #tpu.memory_space<vmem>>, vector<8x6xf32>
    %cst_3 = arith.constant dense<0.000000e+00> : vector<8x512xf32>
    %4 = tpu.matmul %3, %2, %cst_3 {dimension_numbers = #tpu.dot_dimension_numbers<[1], [0], [0], [1], [0, 0, 1, 1], [], []>} : vector<8x6xf32>, vector<6x512xf32>, vector<8x512xf32> -> vector<8x512xf32>
    %c0_4 = arith.constant 0 : index
    %c0_5 = arith.constant 0 : index
    %5 = vector.load %arg4[%c0_4, %c0_5] : memref<8x1xf32, #tpu.memory_space<vmem>>, vector<8x1xf32>
    %6 = vector.broadcast %5 : vector<8x1xf32> to vector<8x512xf32>
    %7 = arith.addf %4, %6 : vector<8x512xf32>
    %c0_6 = arith.constant 0 : index
    %c0_7 = arith.constant 0 : index
    %8 = vector.load %arg2[%c0_6, %c0_7] : memref<8x128xf32, #tpu.memory_space<vmem>>, vector<8x128xf32>
    %c0_8 = arith.constant 0 : index
    %c0_9 = arith.constant 0 : index
    %9 = vector.load %arg5[%c0_8, %c0_9] : memref<128x512xf32, #tpu.memory_space<vmem>>, vector<128x512xf32>
    %cst_10 = arith.constant dense<0.000000e+00> : vector<8x512xf32>
    %10 = tpu.matmul %8, %9, %cst_10 {dimension_numbers = #tpu.dot_dimension_numbers<[1], [0], [0], [1], [0, 0, 1, 1], [], []>} : vector<8x128xf32>, vector<128x512xf32>, vector<8x512xf32> -> vector<8x512xf32>
    %11 = arith.addf %10, %7 : vector<8x512xf32>
    %cst_11 = arith.constant 0.000000e+00 : f32
    %12 = vector.broadcast %cst_11 : f32 to vector<8x512xf32>
    %13 = arith.maximumf %11, %12 : vector<8x512xf32>
    %c0_12 = arith.constant 0 : index
    %c0_13 = arith.constant 0 : index
    %14 = vector.load %arg8[%c0_12, %c0_13] : memref<9x512xf32, #tpu.memory_space<vmem>>, vector<9x512xf32>
    %c17_i32 = arith.constant 17 : i32
    %15 = tpu.dynamic_rotate %13 by %c17_i32 dim 1 : vector<8x512xf32>, i32 -> vector<8x512xf32>
    %16 = vector.extract_strided_slice %14 {offsets = [0, 0], sizes = [1, 512], strides = [1, 1]} : vector<9x512xf32> to vector<1x512xf32>
    %17 = vector.broadcast %16 : vector<1x512xf32> to vector<8x512xf32>
    %18 = arith.mulf %15, %17 : vector<8x512xf32>
    %c16_i32 = arith.constant 16 : i32
    %19 = tpu.dynamic_rotate %13 by %c16_i32 dim 1 : vector<8x512xf32>, i32 -> vector<8x512xf32>
    %20 = vector.extract_strided_slice %14 {offsets = [1, 0], sizes = [1, 512], strides = [1, 1]} : vector<9x512xf32> to vector<1x512xf32>
    %21 = vector.broadcast %20 : vector<1x512xf32> to vector<8x512xf32>
    %22 = arith.mulf %19, %21 : vector<8x512xf32>
    %c15_i32 = arith.constant 15 : i32
    %23 = tpu.dynamic_rotate %13 by %c15_i32 dim 1 : vector<8x512xf32>, i32 -> vector<8x512xf32>
    %24 = vector.extract_strided_slice %14 {offsets = [2, 0], sizes = [1, 512], strides = [1, 1]} : vector<9x512xf32> to vector<1x512xf32>
    %25 = vector.broadcast %24 : vector<1x512xf32> to vector<8x512xf32>
    %26 = arith.mulf %23, %25 : vector<8x512xf32>
    %c1_i32 = arith.constant 1 : i32
    %27 = tpu.dynamic_rotate %13 by %c1_i32 dim 1 : vector<8x512xf32>, i32 -> vector<8x512xf32>
    %28 = vector.extract_strided_slice %14 {offsets = [3, 0], sizes = [1, 512], strides = [1, 1]} : vector<9x512xf32> to vector<1x512xf32>
    %29 = vector.broadcast %28 : vector<1x512xf32> to vector<8x512xf32>
    %30 = arith.mulf %27, %29 : vector<8x512xf32>
    %c511_i32 = arith.constant 511 : i32
    %31 = tpu.dynamic_rotate %13 by %c511_i32 dim 1 : vector<8x512xf32>, i32 -> vector<8x512xf32>
    %32 = vector.extract_strided_slice %14 {offsets = [5, 0], sizes = [1, 512], strides = [1, 1]} : vector<9x512xf32> to vector<1x512xf32>
    %33 = vector.broadcast %32 : vector<1x512xf32> to vector<8x512xf32>
    %34 = arith.mulf %31, %33 : vector<8x512xf32>
    %c497_i32 = arith.constant 497 : i32
    %35 = tpu.dynamic_rotate %13 by %c497_i32 dim 1 : vector<8x512xf32>, i32 -> vector<8x512xf32>
    %36 = vector.extract_strided_slice %14 {offsets = [6, 0], sizes = [1, 512], strides = [1, 1]} : vector<9x512xf32> to vector<1x512xf32>
    %37 = vector.broadcast %36 : vector<1x512xf32> to vector<8x512xf32>
    %38 = arith.mulf %35, %37 : vector<8x512xf32>
    %c496_i32 = arith.constant 496 : i32
    %39 = tpu.dynamic_rotate %13 by %c496_i32 dim 1 : vector<8x512xf32>, i32 -> vector<8x512xf32>
    %40 = vector.extract_strided_slice %14 {offsets = [7, 0], sizes = [1, 512], strides = [1, 1]} : vector<9x512xf32> to vector<1x512xf32>
    %41 = vector.broadcast %40 : vector<1x512xf32> to vector<8x512xf32>
    %42 = arith.mulf %39, %41 : vector<8x512xf32>
    %c495_i32 = arith.constant 495 : i32
    %43 = tpu.dynamic_rotate %13 by %c495_i32 dim 1 : vector<8x512xf32>, i32 -> vector<8x512xf32>
    %44 = vector.extract_strided_slice %14 {offsets = [8, 0], sizes = [1, 512], strides = [1, 1]} : vector<9x512xf32> to vector<1x512xf32>
    %45 = vector.broadcast %44 : vector<1x512xf32> to vector<8x512xf32>
    %46 = arith.mulf %43, %45 : vector<8x512xf32>
    %47 = tpu.concatenate %18, %22, %26, %30, %13, %34, %38, %42, %46 in 0 : vector<8x512xf32>, vector<8x512xf32>, vector<8x512xf32>, vector<8x512xf32>, vector<8x512xf32>, vector<8x512xf32>, vector<8x512xf32>, vector<8x512xf32>, vector<8x512xf32> -> vector<72x512xf32>
    %c0_14 = arith.constant 0 : index
    %c0_15 = arith.constant 0 : index
    %48 = vector.load %arg6[%c0_14, %c0_15] : memref<8x72xf32, #tpu.memory_space<vmem>>, vector<8x72xf32>
    %cst_16 = arith.constant dense<0.000000e+00> : vector<8x512xf32>
    %49 = tpu.matmul %48, %47, %cst_16 {dimension_numbers = #tpu.dot_dimension_numbers<[1], [0], [0], [1], [0, 0, 1, 1], [], []>} : vector<8x72xf32>, vector<72x512xf32>, vector<8x512xf32> -> vector<8x512xf32>
    %c0_17 = arith.constant 0 : index
    %c0_18 = arith.constant 0 : index
    %50 = vector.load %arg7[%c0_17, %c0_18] : memref<8x1xf32, #tpu.memory_space<vmem>>, vector<8x1xf32>
    %51 = vector.broadcast %50 : vector<8x1xf32> to vector<8x512xf32>
    %52 = arith.addf %49, %51 : vector<8x512xf32>
    %c0_19 = arith.constant 0 : index
    %c0_20 = arith.constant 0 : index
    %53 = vector.load %arg9[%c0_19, %c0_20] : memref<8x512xf32, #tpu.memory_space<vmem>>, vector<8x512xf32>
    tpu.vector_store %arg9[%c0_19, %c0_20], %52 {strides = array<i32>} : memref<8x512xf32, #tpu.memory_space<vmem>>, vector<8x512xf32>,
    return
  }
  func.func @transform_0(%arg0: i32) -> (i32, i32) {
    %c0_i32 = arith.constant 0 : i32
    %c0_i32_0 = arith.constant 0 : i32
    %c0_i32_1 = arith.constant 0 : i32
    return %c0_i32, %c0_i32_0 : i32, i32
  }
  func.func @transform_1(%arg0: i32) -> (i32, i32) {
    %c0_i32 = arith.constant 0 : i32
    %c0_i32_0 = arith.constant 0 : i32
    %c0_i32_1 = arith.constant 0 : i32
    return %c0_i32, %c0_i32_0 : i32, i32
  }
  func.func @transform_2(%arg0: i32) -> (i32, i32) {
    %c0_i32 = arith.constant 0 : i32
    %c0_i32_0 = arith.constant 0 : i32
    %c0_i32_1 = arith.constant 0 : i32
    return %c0_i32, %c0_i32_0 : i32, i32
  }
  func.func @transform_3(%arg0: i32) -> (i32, i32) {
    %c0_i32 = arith.constant 0 : i32
    %c0_i32_0 = arith.constant 0 : i32
    %c0_i32_1 = arith.constant 0 : i32
    return %c0_i32, %c0_i32_0 : i32, i32
  }
  func.func @transform_4(%arg0: i32) -> (i32, i32) {
    %c0_i32 = arith.constant 0 : i32
    %c0_i32_0 = arith.constant 0 : i32
    %c0_i32_1 = arith.constant 0 : i32
    return %c0_i32, %c0_i32_0 : i32, i32
  }
  func.func @transform_5(%arg0: i32) -> (i32, i32) {
    %c0_i32 = arith.constant 0 : i32
    %c0_i32_0 = arith.constant 0 : i32
    %c0_i32_1 = arith.constant 0 : i32
    return %c0_i32, %c0_i32_0 : i32, i32
  }
  func.func @transform_6(%arg0: i32) -> (i32, i32) {
    %c0_i32 = arith.constant 0 : i32
    %c0_i32_0 = arith.constant 0 : i32
    %c0_i32_1 = arith.constant 0 : i32
    return %c0_i32, %c0_i32_0 : i32, i32
  }
  func.func @transform_7(%arg0: i32) -> (i32, i32) {
    %c0_i32 = arith.constant 0 : i32
    %c0_i32_0 = arith.constant 0 : i32
    %c0_i32_1 = arith.constant 0 : i32
    return %c0_i32, %c0_i32_0 : i32, i32
  }
  func.func @transform_8(%arg0: i32) -> (i32, i32) {
    %c0_i32 = arith.constant 0 : i32
    %c0_i32_0 = arith.constant 0 : i32
    %c0_i32_1 = arith.constant 0 : i32
    return %c0_i32, %c0_i32_0 : i32, i32
  }
}

</mosaic_0001>

<llo_original>
// kernel: forward.1
$region0: #{forward.1}
  #allocation0 [shape = 'u32[]', space=smem, size = 0x4, offset = 0x4, fixed_abs, tag = 'smem constant byte address 0x4 - core index']
  #allocation1 [shape = 'u32[72,128]{1,0:T(1,128)}', space=vmem, size = 0x9000, scoped, tag = 'internal scratch']
  %s0 = inlined_call_operand.vmem [shape: f32[6,512], index: 0, kind: input, shape index: {}]
  %s1 = inlined_call_operand.vmem [shape: f32[8,128], index: 1, kind: input, shape index: {}]
  %s2 = inlined_call_operand.hbm [shape: f32[8,6], index: 2, kind: input, shape index: {}]
  %s3 = inlined_call_operand.vmem [shape: f32[8,1], index: 3, kind: input, shape index: {}]
  %s4 = inlined_call_operand.vmem [shape: f32[128,512], index: 4, kind: input, shape index: {}]
  %s5 = inlined_call_operand.vmem [shape: f32[8,72], index: 5, kind: input, shape index: {}]
  %s6 = inlined_call_operand.vmem [shape: f32[8,1], index: 6, kind: input, shape index: {}]
  %s7 = inlined_call_operand.hbm [shape: f32[9,512], index: 7, kind: input, shape index: {}]
  %s8 = inlined_call_operand.vmem [shape: f32[8,512], index: 8, kind: output, shape index: {}]
  %s9 = sld [smem:[#allocation0]]
  $region50: #{forward.1} parent=0
    _
  %s11 = ssub.s32 1, %s9
  %s12 = scalar_select 0, %s11, %s9
  $region1: #{forward.1} parent=0
    #allocation2 [shape = 'u8[4096]{0}', space=vmem, size = 0x1000, scoped, tag = 'input window, operand 2, single buffered']
    #allocation3 [shape = 's32[1]{0}', space=sflag, size = 0x4, scoped, tag = 'scoped memory for forward.1']
    #allocation4 [shape = 'u8[32768]{0}', space=vmem, size = 0x8000, scoped, tag = 'input window, operand 7, single buffered']
    #allocation5 [shape = 's32[1]{0}', space=sflag, size = 0x4, scoped, tag = 'scoped memory for forward.1']
    %13 = vsyncpa [#allocation3], 0
    %14 = vsyncpa [#allocation5], 0
    // Predicated region
    $region2: #{forward.1} parent=1 // pred_check
      _
    $region3: #{forward.1} parent=1 // pred_check_branch
      %16 = sbr.rel (0) target = $region5
    $region4: #{forward.1} parent=1 // pred_region
      _
    $region5: #{forward.1} parent=1 // pred_fallthru
      _
    // Predicated region
    $region6: #{forward.1} parent=1 // pred_check
      _
    $region7: #{forward.1} parent=1 // pred_check_branch
      %18 = sbr.rel (0) target = $region9
    $region8: #{forward.1} parent=1 // pred_region
      _
    $region9: #{forward.1} parent=1 // pred_fallthru
      _
    // Predicated region
    $region10: #{forward.1} parent=1 // pred_check
      _
    $region11: #{forward.1} parent=1 // pred_check_branch
      %20 = sbr.rel (0) target = $region13
    $region12: #{forward.1} parent=1 // pred_region
      %22 = vsyncadd [#allocation3], 0
      %s24 = sshll.u32 %s2, 4
      %s25 = int_to_ptr.hbm [resolvable:$true] %s24
      %s26 = sshll.u32 [#allocation2], 4
      %s27 = int_to_ptr.vmem [resolvable:$true] %s26
      %29 = dma.hbm_to_vmem [thread:$0]  %s25, 128, %s27, [#allocation3]
    $region13: #{forward.1} parent=1 // pred_fallthru
      _
    // Predicated region
    $region14: #{forward.1} parent=1 // pred_check
      _
    $region15: #{forward.1} parent=1 // pred_check_branch
      %31 = sbr.rel (0) target = $region17
    $region16: #{forward.1} parent=1 // pred_region
      _
    $region17: #{forward.1} parent=1 // pred_fallthru
      _
    // Predicated region
    $region18: #{forward.1} parent=1 // pred_check
      _
    $region19: #{forward.1} parent=1 // pred_check_branch
      %33 = sbr.rel (0) target = $region21
    $region20: #{forward.1} parent=1 // pred_region
      _
    $region21: #{forward.1} parent=1 // pred_fallthru
      _
    // Predicated region
    $region22: #{forward.1} parent=1 // pred_check
      _
    $region23: #{forward.1} parent=1 // pred_check_branch
      %35 = sbr.rel (0) target = $region25
    $region24: #{forward.1} parent=1 // pred_region
      _
    $region25: #{forward.1} parent=1 // pred_fallthru
      _
    // Predicated region
    $region26: #{forward.1} parent=1 // pred_check
      _
    $region27: #{forward.1} parent=1 // pred_check_branch
      %37 = sbr.rel (0) target = $region29
    $region28: #{forward.1} parent=1 // pred_region
      _
    $region29: #{forward.1} parent=1 // pred_fallthru
      _
    // Predicated region
    $region30: #{forward.1} parent=1 // pred_check
      _
    $region31: #{forward.1} parent=1 // pred_check_branch
      %39 = sbr.rel (0) target = $region33
    $region32: #{forward.1} parent=1 // pred_region
      %41 = vsyncadd [#allocation5], 0
      %s42 = sshll.u32 %s7, 4
      %s43 = int_to_ptr.hbm [resolvable:$true] %s42
      %s44 = sshll.u32 [#allocation4], 4
      %s45 = int_to_ptr.vmem [resolvable:$true] %s44
      %50 = dma.hbm_to_vmem [thread:$0]  %s43, 1024, %s45, [#allocation5], 512, 512, 32
    $region33: #{forward.1} parent=1 // pred_fallthru
      _
    // Predicated region
    $region34: #{forward.1} parent=1 // pred_check
      _
    $region35: #{forward.1} parent=1 // pred_check_branch
      %52 = sbr.rel (0) target = $region37
    $region36: #{forward.1} parent=1 // pred_region
      %54 = dma.done [#allocation3], 128
    $region37: #{forward.1} parent=1 // pred_fallthru
      _
    // Predicated region
    $region38: #{forward.1} parent=1 // pred_check
      _
    $region39: #{forward.1} parent=1 // pred_check_branch
      %56 = sbr.rel (0) target = $region41
    $region40: #{forward.1} parent=1 // pred_region
      %58 = dma.done [#allocation5], 1024
    $region41: #{forward.1} parent=1 // pred_fallthru
      _
    %v59 = vld [vmem:[%s0] sm:$0x3f]
    %v60 = vld [vmem:[%s0 + $0x8] sm:$0x3f]
    %v61 = vld [vmem:[%s0 + $0x10] sm:$0x3f]
    %v62 = vld [vmem:[%s0 + $0x18] sm:$0x3f]
    %v63 = vmax.f32 %v59, 0.0
    %v64 = vmax.f32 %v60, 0.0
    %v65 = vmax.f32 %v61, 0.0
    %v66 = vmax.f32 %v62, 0.0
    %v67 = vld [vmem:[#allocation2] sm:$0xff]
    %v68 = vld [vmem:[%s3] sm:$0xff]
    %70 = vset.pattern.permute.xlu0 0
    %71 = vperm.xlu0 %70, %v68
    %v72 = vpop.permute.xlu0 %71
    %vm74 = vcmask 48128
    %v76 = vsel %vm74, %v67, 0
    %vm78 = vcmask 1045504
    %v80 = vsel %vm78, %v63, 0
    %v83 = vsel %vm78, %v64, 0
    %v86 = vsel %vm78, %v65, 0
    %v89 = vsel %vm78, %v66, 0
    %91 = vmatpush.msra.mxu0 0.0
    %92 = vmatpush.msra.mxu0 0.0
    %93 = vmatpush.msra.mxu0 0.0
    %94 = vmatpush.msra.mxu0 0.0
    %95 = vmatpush.msra.mxu0 0.0
    %96 = vmatpush.msra.mxu0 0.0
    %97 = vmatpush.msra.mxu0 0.0
    %98 = vmatpush.msra.mxu0 0.0
    %99 = vmatpush.msra.mxu0 0.0
    %100 = vmatpush.msra.mxu0 0.0
    %101 = vmatpush.msra.mxu0 0.0
    %102 = vmatpush.msra.mxu0 0.0
    %103 = vmatpush.msra.mxu0 0.0
    %104 = vmatpush.msra.mxu0 0.0
    %105 = vmatpush.msra.mxu0 0.0
    %106 = vmatpush.msra.mxu0 %v80
    %107 = vmatmul.f32.gmra.mxu0 %v76
    %v108 = vpop.f32.mrf.mxu0
    %v109 = vadd.f32 %v72, %v108
    %110 = vdwg.mxu0
    %111 = vmatpush.msra.mxu0 0.0
    %112 = vmatpush.msra.mxu0 0.0
    %113 = vmatpush.msra.mxu0 0.0
    %114 = vmatpush.msra.mxu0 0.0
    %115 = vmatpush.msra.mxu0 0.0
    %116 = vmatpush.msra.mxu0 0.0
    %117 = vmatpush.msra.mxu0 0.0
    %118 = vmatpush.msra.mxu0 0.0
    %119 = vmatpush.msra.mxu0 0.0
    %120 = vmatpush.msra.mxu0 0.0
    %121 = vmatpush.msra.mxu0 0.0
    %122 = vmatpush.msra.mxu0 0.0
    %123 = vmatpush.msra.mxu0 0.0
    %124 = vmatpush.msra.mxu0 0.0
    %125 = vmatpush.msra.mxu0 0.0
    %126 = vmatpush.msra.mxu0 %v83
    %127 = vmatmul.f32.gmra.mxu0 %v76
    %v128 = vpop.f32.mrf.mxu0
    %v129 = vadd.f32 %v72, %v128
    %130 = vdwg.mxu0
    %131 = vmatpush.msra.mxu0 0.0
    %132 = vmatpush.msra.mxu0 0.0
    %133 = vmatpush.msra.mxu0 0.0
    %134 = vmatpush.msra.mxu0 0.0
    %135 = vmatpush.msra.mxu0 0.0
    %136 = vmatpush.msra.mxu0 0.0
    %137 = vmatpush.msra.mxu0 0.0
    %138 = vmatpush.msra.mxu0 0.0
    %139 = vmatpush.msra.mxu0 0.0
    %140 = vmatpush.msra.mxu0 0.0
    %141 = vmatpush.msra.mxu0 0.0
    %142 = vmatpush.msra.mxu0 0.0
    %143 = vmatpush.msra.mxu0 0.0
    %144 = vmatpush.msra.mxu0 0.0
    %145 = vmatpush.msra.mxu0 0.0
    %146 = vmatpush.msra.mxu0 %v86
    %147 = vmatmul.f32.gmra.mxu0 %v76
    %v148 = vpop.f32.mrf.mxu0
    %v149 = vadd.f32 %v72, %v148
    %150 = vdwg.mxu0
    %151 = vmatpush.msra.mxu0 0.0
    %152 = vmatpush.msra.mxu0 0.0
    %153 = vmatpush.msra.mxu0 0.0
    %154 = vmatpush.msra.mxu0 0.0
    %155 = vmatpush.msra.mxu0 0.0
    %156 = vmatpush.msra.mxu0 0.0
    %157 = vmatpush.msra.mxu0 0.0
    %158 = vmatpush.msra.mxu0 0.0
    %159 = vmatpush.msra.mxu0 0.0
    %160 = vmatpush.msra.mxu0 0.0
    %161 = vmatpush.msra.mxu0 0.0
    %162 = vmatpush.msra.mxu0 0.0
    %163 = vmatpush.msra.mxu0 0.0
    %164 = vmatpush.msra.mxu0 0.0
    %165 = vmatpush.msra.mxu0 0.0
    %166 = vmatpush.msra.mxu0 %v89
    %167 = vmatmul.f32.gmra.mxu0 %v76
    %v168 = vpop.f32.mrf.mxu0
    %v169 = vadd.f32 %v72, %v168
    %170 = vdwg.mxu0
    %v171 = vld [vmem:[%s1] sm:$0xff]
    %v172 = vld [vmem:[%s4] sm:$0xff]
    %v173 = vld [vmem:[%s4 + $0x8] sm:$0xff]
    %v174 = vld [vmem:[%s4 + $0x10] sm:$0xff]
    %v175 = vld [vmem:[%s4 + $0x18] sm:$0xff]
    %v176 = vld [vmem:[%s4 + $0x20] sm:$0xff]
    %v177 = vld [vmem:[%s4 + $0x28] sm:$0xff]
    %v178 = vld [vmem:[%s4 + $0x30] sm:$0xff]
    %v179 = vld [vmem:[%s4 + $0x38] sm:$0xff]
    %v180 = vld [vmem:[%s4 + $0x40] sm:$0xff]
    %v181 = vld [vmem:[%s4 + $0x48] sm:$0xff]
    %v182 = vld [vmem:[%s4 + $0x50] sm:$0xff]
    %v183 = vld [vmem:[%s4 + $0x58] sm:$0xff]
    %v184 = vld [vmem:[%s4 + $0x60] sm:$0xff]
    %v185 = vld [vmem:[%s4 + $0x68] sm:$0xff]
    %v186 = vld [vmem:[%s4 + $0x70] sm:$0xff]
    %v187 = vld [vmem:[%s4 + $0x78] sm:$0xff]
    %v188 = vld [vmem:[%s4 + $0x80] sm:$0xff]
    %v189 = vld [vmem:[%s4 + $0x88] sm:$0xff]
    %v190 = vld [vmem:[%s4 + $0x90] sm:$0xff]
    %v191 = vld [vmem:[%s4 + $0x98] sm:$0xff]
    %v192 = vld [vmem:[%s4 + $0xa0] sm:$0xff]
    %v193 = vld [vmem:[%s4 + $0xa8] sm:$0xff]
    %v194 = vld [vmem:[%s4 + $0xb0] sm:$0xff]
    %v195 = vld [vmem:[%s4 + $0xb8] sm:$0xff]
    %v196 = vld [vmem:[%s4 + $0xc0] sm:$0xff]
    %v197 = vld [vmem:[%s4 + $0xc8] sm:$0xff]
    %v198 = vld [vmem:[%s4 + $0xd0] sm:$0xff]
    %v199 = vld [vmem:[%s4 + $0xd8] sm:$0xff]
    %v200 = vld [vmem:[%s4 + $0xe0] sm:$0xff]
    %v201 = vld [vmem:[%s4 + $0xe8] sm:$0xff]
    %v202 = vld [vmem:[%s4 + $0xf0] sm:$0xff]
    %v203 = vld [vmem:[%s4 + $0xf8] sm:$0xff]
    %v204 = vld [vmem:[%s4 + $0x100] sm:$0xff]
    %v205 = vld [vmem:[%s4 + $0x108] sm:$0xff]
    %v206 = vld [vmem:[%s4 + $0x110] sm:$0xff]
    %v207 = vld [vmem:[%s4 + $0x118] sm:$0xff]
    %v208 = vld [vmem:[%s4 + $0x120] sm:$0xff]
    %v209 = vld [vmem:[%s4 + $0x128] sm:$0xff]
    %v210 = vld [vmem:[%s4 + $0x130] sm:$0xff]
    %v211 = vld [vmem:[%s4 + $0x138] sm:$0xff]
    %v212 = vld [vmem:[%s4 + $0x140] sm:$0xff]
    %v213 = vld [vmem:[%s4 + $0x148] sm:$0xff]
    %v214 = vld [vmem:[%s4 + $0x150] sm:$0xff]
    %v215 = vld [vmem:[%s4 + $0x158] sm:$0xff]
    %v216 = vld [vmem:[%s4 + $0x160] sm:$0xff]
    %v217 = vld [vmem:[%s4 + $0x168] sm:$0xff]
    %v218 = vld [vmem:[%s4 + $0x170] sm:$0xff]
    %v219 = vld [vmem:[%s4 + $0x178] sm:$0xff]
    %v220 = vld [vmem:[%s4 + $0x180] sm:$0xff]
    %v221 = vld [vmem:[%s4 + $0x188] sm:$0xff]
    %v222 = vld [vmem:[%s4 + $0x190] sm:$0xff]
    %v223 = vld [vmem:[%s4 + $0x198] sm:$0xff]
    %v224 = vld [vmem:[%s4 + $0x1a0] sm:$0xff]
    %v225 = vld [vmem:[%s4 + $0x1a8] sm:$0xff]
    %v226 = vld [vmem:[%s4 + $0x1b0] sm:$0xff]
    %v227 = vld [vmem:[%s4 + $0x1b8] sm:$0xff]
    %v228 = vld [vmem:[%s4 + $0x1c0] sm:$0xff]
    %v229 = vld [vmem:[%s4 + $0x1c8] sm:$0xff]
    %v230 = vld [vmem:[%s4 + $0x1d0] sm:$0xff]
    %v231 = vld [vmem:[%s4 + $0x1d8] sm:$0xff]
    %v232 = vld [vmem:[%s4 + $0x1e0] sm:$0xff]
    %v233 = vld [vmem:[%s4 + $0x1e8] sm:$0xff]
    %v234 = vld [vmem:[%s4 + $0x1f0] sm:$0xff]
    %v235 = vld [vmem:[%s4 + $0x1f8] sm:$0xff]
    %236 = vmatpush.msra.mxu0 %v232
    %237 = vmatpush.msra.mxu0 %v228
    %238 = vmatpush.msra.mxu0 %v224
    %239 = vmatpush.msra.mxu0 %v220
    %240 = vmatpush.msra.mxu0 %v216
    %241 = vmatpush.msra.mxu0 %v212
    %242 = vmatpush.msra.mxu0 %v208
    %243 = vmatpush.msra.mxu0 %v204
    %244 = vmatpush.msra.mxu0 %v200
    %245 = vmatpush.msra.mxu0 %v196
    %246 = vmatpush.msra.mxu0 %v192
    %247 = vmatpush.msra.mxu0 %v188
    %248 = vmatpush.msra.mxu0 %v184
    %249 = vmatpush.msra.mxu0 %v180
    %250 = vmatpush.msra.mxu0 %v176
    %251 = vmatpush.msra.mxu0 %v172
    %252 = vmatmul.f32.gmra.mxu0 %v171
    %v253 = vpop.f32.mrf.mxu0
    %v254 = vadd.f32 %v109, %v253
    %255 = vdwg.mxu0
    %256 = vmatpush.msra.mxu0 %v233
    %257 = vmatpush.msra.mxu0 %v229
    %258 = vmatpush.msra.mxu0 %v225
    %259 = vmatpush.msra.mxu0 %v221
    %260 = vmatpush.msra.mxu0 %v217
    %261 = vmatpush.msra.mxu0 %v213
    %262 = vmatpush.msra.mxu0 %v209
    %263 = vmatpush.msra.mxu0 %v205
    %264 = vmatpush.msra.mxu0 %v201
    %265 = vmatpush.msra.mxu0 %v197
    %266 = vmatpush.msra.mxu0 %v193
    %267 = vmatpush.msra.mxu0 %v189
    %268 = vmatpush.msra.mxu0 %v185
    %269 = vmatpush.msra.mxu0 %v181
    %270 = vmatpush.msra.mxu0 %v177
    %271 = vmatpush.msra.mxu0 %v173
    %272 = vmatmul.f32.gmra.mxu0 %v171
    %v273 = vpop.f32.mrf.mxu0
    %v274 = vadd.f32 %v129, %v273
    %275 = vdwg.mxu0
    %276 = vmatpush.msra.mxu0 %v234
    %277 = vmatpush.msra.mxu0 %v230
    %278 = vmatpush.msra.mxu0 %v226
    %279 = vmatpush.msra.mxu0 %v222
    %280 = vmatpush.msra.mxu0 %v218
    %281 = vmatpush.msra.mxu0 %v214
    %282 = vmatpush.msra.mxu0 %v210
    %283 = vmatpush.msra.mxu0 %v206
    %284 = vmatpush.msra.mxu0 %v202
    %285 = vmatpush.msra.mxu0 %v198
    %286 = vmatpush.msra.mxu0 %v194
    %287 = vmatpush.msra.mxu0 %v190
    %288 = vmatpush.msra.mxu0 %v186
    %289 = vmatpush.msra.mxu0 %v182
    %290 = vmatpush.msra.mxu0 %v178
    %291 = vmatpush.msra.mxu0 %v174
    %292 = vmatmul.f32.gmra.mxu0 %v171
    %v293 = vpop.f32.mrf.mxu0
    %v294 = vadd.f32 %v149, %v293
    %295 = vdwg.mxu0
    %296 = vmatpush.msra.mxu0 %v235
    %297 = vmatpush.msra.mxu0 %v231
    %298 = vmatpush.msra.mxu0 %v227
    %299 = vmatpush.msra.mxu0 %v223
    %300 = vmatpush.msra.mxu0 %v219
    %301 = vmatpush.msra.mxu0 %v215
    %302 = vmatpush.msra.mxu0 %v211
    %303 = vmatpush.msra.mxu0 %v207
    %304 = vmatpush.msra.mxu0 %v203
    %305 = vmatpush.msra.mxu0 %v199
    %306 = vmatpush.msra.mxu0 %v195
    %307 = vmatpush.msra.mxu0 %v191
    %308 = vmatpush.msra.mxu0 %v187
    %309 = vmatpush.msra.mxu0 %v183
    %310 = vmatpush.msra.mxu0 %v179
    %311 = vmatpush.msra.mxu0 %v175
    %312 = vmatmul.f32.gmra.mxu0 %v171
    %v313 = vpop.f32.mrf.mxu0
    %v314 = vadd.f32 %v169, %v313
    %315 = vdwg.mxu0
    %v316 = vmax.f32 %v254, 0.0
    %v317 = vmax.f32 %v274, 0.0
    %v318 = vmax.f32 %v294, 0.0
    %v319 = vmax.f32 %v314, 0.0
    %v320 = vld [vmem:[#allocation4] sm:$0xff]
    %v321 = vld [vmem:[#allocation4 + $0x8] sm:$0xff]
    %v322 = vld [vmem:[#allocation4 + $0x10] sm:$0xff]
    %v323 = vld [vmem:[#allocation4 + $0x18] sm:$0xff]
    %v324 = vld [vmem:[#allocation4 + $0x20] sm:$0x1]
    %v325 = vld [vmem:[#allocation4 + $0x28] sm:$0x1]
    %v326 = vld [vmem:[#allocation4 + $0x30] sm:$0x1]
    %v327 = vld [vmem:[#allocation4 + $0x38] sm:$0x1]
    %328 = vrot.lane.b32.xlu0 %v316, 17
    %v329 = vpop.permute.xlu0 %328
    %330 = vrot.lane.b32.xlu0 %v317, 17
    %v331 = vpop.permute.xlu0 %330
    %332 = vrot.lane.b32.xlu0 %v318, 17
    %v333 = vpop.permute.xlu0 %332
    %334 = vrot.lane.b32.xlu0 %v319, 17
    %v335 = vpop.permute.xlu0 %334
    %v336 = vlaneseq
    %v337 = vand.u32 %v336, 127
    %vm338 = vcmp.lt.s32.totalorder %v337, 17
    %v339 = vsel %vm338, %v333, %v335
    %v340 = vsel %vm338, %v331, %v333
    %v341 = vsel %vm338, %v329, %v331
    %v342 = vsel %vm338, %v335, %v329
    %v343 = vperm.slane %v320, 0
    %v344 = vperm.slane %v321, 0
    %v345 = vperm.slane %v322, 0
    %v346 = vperm.slane %v323, 0
    %v347 = vmul.f32 %v342, %v343
    %v348 = vmul.f32 %v341, %v344
    %v349 = vmul.f32 %v340, %v345
    %v350 = vmul.f32 %v339, %v346
    %351 = vrot.lane.b32.xlu0 %v316, 16
    %v352 = vpop.permute.xlu0 %351
    %353 = vrot.lane.b32.xlu0 %v317, 16
    %v354 = vpop.permute.xlu0 %353
    %355 = vrot.lane.b32.xlu0 %v318, 16
    %v356 = vpop.permute.xlu0 %355
    %357 = vrot.lane.b32.xlu0 %v319, 16
    %v358 = vpop.permute.xlu0 %357
    %vm359 = vcmp.lt.s32.totalorder %v337, 16
    %v360 = vsel %vm359, %v356, %v358
    %v361 = vsel %vm359, %v354, %v356
    %v362 = vsel %vm359, %v352, %v354
    %v363 = vsel %vm359, %v358, %v352
    %v364 = vperm.slane %v320, 1
    %v365 = vperm.slane %v321, 1
    %v366 = vperm.slane %v322, 1
    %v367 = vperm.slane %v323, 1
    %v368 = vmul.f32 %v363, %v364
    %v369 = vmul.f32 %v362, %v365
    %v370 = vmul.f32 %v361, %v366
    %v371 = vmul.f32 %v360, %v367
    %372 = vrot.lane.b32.xlu0 %v316, 15
    %v373 = vpop.permute.xlu0 %372
    %374 = vrot.lane.b32.xlu0 %v317, 15
    %v375 = vpop.permute.xlu0 %374
    %376 = vrot.lane.b32.xlu0 %v318, 15
    %v377 = vpop.permute.xlu0 %376
    %378 = vrot.lane.b32.xlu0 %v319, 15
    %v379 = vpop.permute.xlu0 %378
    %vm380 = vcmp.lt.s32.totalorder %v337, 15
    %v381 = vsel %vm380, %v377, %v379
    %v382 = vsel %vm380, %v375, %v377
    %v383 = vsel %vm380, %v373, %v375
    %v384 = vsel %vm380, %v379, %v373
    %v385 = vperm.slane %v320, 2
    %v386 = vperm.slane %v321, 2
    %v387 = vperm.slane %v322, 2
    %v388 = vperm.slane %v323, 2
    %v389 = vmul.f32 %v384, %v385
    %v390 = vmul.f32 %v383, %v386
    %v391 = vmul.f32 %v382, %v387
    %v392 = vmul.f32 %v381, %v388
    %393 = vrot.lane.b32.xlu0 %v316, 1
    %v394 = vpop.permute.xlu0 %393
    %395 = vrot.lane.b32.xlu0 %v317, 1
    %v396 = vpop.permute.xlu0 %395
    %397 = vrot.lane.b32.xlu0 %v318, 1
    %v398 = vpop.permute.xlu0 %397
    %399 = vrot.lane.b32.xlu0 %v319, 1
    %v400 = vpop.permute.xlu0 %399
    %vm401 = vcmp.lt.s32.totalorder %v337, 1
    %v402 = vsel %vm401, %v398, %v400
    %v403 = vsel %vm401, %v396, %v398
    %v404 = vsel %vm401, %v394, %v396
    %v405 = vsel %vm401, %v400, %v394
    %v406 = vperm.slane %v320, 3
    %v407 = vperm.slane %v321, 3
    %v408 = vperm.slane %v322, 3
    %v409 = vperm.slane %v323, 3
    %v410 = vmul.f32 %v405, %v406
    %v411 = vmul.f32 %v404, %v407
    %v412 = vmul.f32 %v403, %v408
    %v413 = vmul.f32 %v402, %v409
    %414 = vrot.lane.b32.xlu0 %v316, 127
    %v415 = vpop.permute.xlu0 %414
    %416 = vrot.lane.b32.xlu0 %v317, 127
    %v417 = vpop.permute.xlu0 %416
    %418 = vrot.lane.b32.xlu0 %v318, 127
    %v419 = vpop.permute.xlu0 %418
    %420 = vrot.lane.b32.xlu0 %v319, 127
    %v421 = vpop.permute.xlu0 %420
    %vm422 = vcmp.lt.s32.totalorder %v337, 127
    %v423 = vsel %vm422, %v419, %v421
    %v424 = vsel %vm422, %v417, %v419
    %v425 = vsel %vm422, %v415, %v417
    %v426 = vsel %vm422, %v421, %v415
    %v427 = vperm.slane %v320, 5
    %v428 = vperm.slane %v321, 5
    %v429 = vperm.slane %v322, 5
    %v430 = vperm.slane %v323, 5
    %v431 = vmul.f32 %v425, %v427
    %v432 = vmul.f32 %v424, %v428
    %v433 = vmul.f32 %v423, %v429
    %v434 = vmul.f32 %v426, %v430
    %435 = vrot.lane.b32.xlu0 %v316, 113
    %v436 = vpop.permute.xlu0 %435
    %437 = vrot.lane.b32.xlu0 %v317, 113
    %v438 = vpop.permute.xlu0 %437
    %439 = vrot.lane.b32.xlu0 %v318, 113
    %v440 = vpop.permute.xlu0 %439
    %441 = vrot.lane.b32.xlu0 %v319, 113
    %v442 = vpop.permute.xlu0 %441
    %vm443 = vcmp.lt.s32.totalorder %v337, 113
    %v444 = vsel %vm443, %v440, %v442
    %v445 = vsel %vm443, %v438, %v440
    %v446 = vsel %vm443, %v436, %v438
    %v447 = vsel %vm443, %v442, %v436
    %v448 = vperm.slane %v320, 6
    %v449 = vperm.slane %v321, 6
    %v450 = vperm.slane %v322, 6
    %v451 = vperm.slane %v323, 6
    %v452 = vmul.f32 %v446, %v448
    %v453 = vmul.f32 %v445, %v449
    %v454 = vmul.f32 %v444, %v450
    %v455 = vmul.f32 %v447, %v451
    %456 = vrot.lane.b32.xlu0 %v316, 112
    %v457 = vpop.permute.xlu0 %456
    %458 = vrot.lane.b32.xlu0 %v317, 112
    %v459 = vpop.permute.xlu0 %458
    %460 = vrot.lane.b32.xlu0 %v318, 112
    %v461 = vpop.permute.xlu0 %460
    %462 = vrot.lane.b32.xlu0 %v319, 112
    %v463 = vpop.permute.xlu0 %462
    %vm464 = vcmp.lt.s32.totalorder %v337, 112
    %v465 = vsel %vm464, %v461, %v463
    %v466 = vsel %vm464, %v459, %v461
    %v467 = vsel %vm464, %v457, %v459
    %v468 = vsel %vm464, %v463, %v457
    %v469 = vperm.slane %v320, 7
    %v470 = vperm.slane %v321, 7
    %v471 = vperm.slane %v322, 7
    %v472 = vperm.slane %v323, 7
    %v473 = vmul.f32 %v467, %v469
    %v474 = vmul.f32 %v466, %v470
    %v475 = vmul.f32 %v465, %v471
    %v476 = vmul.f32 %v468, %v472
    %477 = vrot.lane.b32.xlu0 %v316, 111
    %v478 = vpop.permute.xlu0 %477
    %479 = vrot.lane.b32.xlu0 %v317, 111
    %v480 = vpop.permute.xlu0 %479
    %481 = vrot.lane.b32.xlu0 %v318, 111
    %v482 = vpop.permute.xlu0 %481
    %483 = vrot.lane.b32.xlu0 %v319, 111
    %v484 = vpop.permute.xlu0 %483
    %vm485 = vcmp.lt.s32.totalorder %v337, 111
    %v486 = vsel %vm485, %v482, %v484
    %v487 = vsel %vm485, %v480, %v482
    %v488 = vsel %vm485, %v478, %v480
    %v489 = vsel %vm485, %v484, %v478
    %v490 = vperm.slane %v324, 0
    %v491 = vperm.slane %v325, 0
    %v492 = vperm.slane %v326, 0
    %v493 = vperm.slane %v327, 0
    %v494 = vmul.f32 %v488, %v490
    %v495 = vmul.f32 %v487, %v491
    %v496 = vmul.f32 %v486, %v492
    %v497 = vmul.f32 %v489, %v493
    %v498 = vld [vmem:[%s5] sm:$0xff]
    %v499 = vld [vmem:[%s6] sm:$0xff]
    %501 = vset.pattern.permute.xlu0 0
    %502 = vperm.xlu0 %501, %v499
    %v503 = vpop.permute.xlu0 %502
    %vm505 = vcmask 588800
    %v507 = vsel %vm505, %v498, 0
    %509 = vmatpush.msra.mxu0 0.0
    %510 = vmatpush.msra.mxu0 0.0
    %511 = vmatpush.msra.mxu0 0.0
    %512 = vmatpush.msra.mxu0 0.0
    %513 = vmatpush.msra.mxu0 0.0
    %514 = vmatpush.msra.mxu0 0.0
    %515 = vmatpush.msra.mxu0 0.0
    %516 = vmatpush.msra.mxu0 %v494
    %517 = vmatpush.msra.mxu0 %v473
    %518 = vmatpush.msra.mxu0 %v452
    %519 = vmatpush.msra.mxu0 %v431
    %520 = vmatpush.msra.mxu0 %v316
    %521 = vmatpush.msra.mxu0 %v410
    %522 = vmatpush.msra.mxu0 %v389
    %523 = vmatpush.msra.mxu0 %v368
    %524 = vmatpush.msra.mxu0 %v347
    %525 = vmatmul.f32.gmra.mxu0 %v507
    %v526 = vpop.f32.mrf.mxu0
    %v527 = vadd.f32 %v503, %v526
    %528 = vdwg.mxu0
    %529 = vmatpush.msra.mxu0 0.0
    %530 = vmatpush.msra.mxu0 0.0
    %531 = vmatpush.msra.mxu0 0.0
    %532 = vmatpush.msra.mxu0 0.0
    %533 = vmatpush.msra.mxu0 0.0
    %534 = vmatpush.msra.mxu0 0.0
    %535 = vmatpush.msra.mxu0 0.0
    %536 = vmatpush.msra.mxu0 %v495
    %537 = vmatpush.msra.mxu0 %v474
    %538 = vmatpush.msra.mxu0 %v453
    %539 = vmatpush.msra.mxu0 %v432
    %540 = vmatpush.msra.mxu0 %v317
    %541 = vmatpush.msra.mxu0 %v411
    %542 = vmatpush.msra.mxu0 %v390
    %543 = vmatpush.msra.mxu0 %v369
    %544 = vmatpush.msra.mxu0 %v348
    %545 = vmatmul.f32.gmra.mxu0 %v507
    %v546 = vpop.f32.mrf.mxu0
    %v547 = vadd.f32 %v503, %v546
    %548 = vdwg.mxu0
    %549 = vmatpush.msra.mxu0 0.0
    %550 = vmatpush.msra.mxu0 0.0
    %551 = vmatpush.msra.mxu0 0.0
    %552 = vmatpush.msra.mxu0 0.0
    %553 = vmatpush.msra.mxu0 0.0
    %554 = vmatpush.msra.mxu0 0.0
    %555 = vmatpush.msra.mxu0 0.0
    %556 = vmatpush.msra.mxu0 %v496
    %557 = vmatpush.msra.mxu0 %v475
    %558 = vmatpush.msra.mxu0 %v454
    %559 = vmatpush.msra.mxu0 %v433
    %560 = vmatpush.msra.mxu0 %v318
    %561 = vmatpush.msra.mxu0 %v412
    %562 = vmatpush.msra.mxu0 %v391
    %563 = vmatpush.msra.mxu0 %v370
    %564 = vmatpush.msra.mxu0 %v349
    %565 = vmatmul.f32.gmra.mxu0 %v507
    %v566 = vpop.f32.mrf.mxu0
    %v567 = vadd.f32 %v503, %v566
    %568 = vdwg.mxu0
    %569 = vmatpush.msra.mxu0 0.0
    %570 = vmatpush.msra.mxu0 0.0
    %571 = vmatpush.msra.mxu0 0.0
    %572 = vmatpush.msra.mxu0 0.0
    %573 = vmatpush.msra.mxu0 0.0
    %574 = vmatpush.msra.mxu0 0.0
    %575 = vmatpush.msra.mxu0 0.0
    %576 = vmatpush.msra.mxu0 %v497
    %577 = vmatpush.msra.mxu0 %v476
    %578 = vmatpush.msra.mxu0 %v455
    %579 = vmatpush.msra.mxu0 %v434
    %580 = vmatpush.msra.mxu0 %v319
    %581 = vmatpush.msra.mxu0 %v413
    %582 = vmatpush.msra.mxu0 %v392
    %583 = vmatpush.msra.mxu0 %v371
    %584 = vmatpush.msra.mxu0 %v350
    %585 = vmatmul.f32.gmra.mxu0 %v507
    %v586 = vpop.f32.mrf.mxu0
    %v587 = vadd.f32 %v503, %v586
    %588 = vdwg.mxu0
    %589 = vst [vmem:[%s8] sm:$0xff] %v527
    %590 = vst [vmem:[%s8 + $0x8] sm:$0xff] %v547
    %591 = vst [vmem:[%s8 + $0x10] sm:$0xff] %v567
    %592 = vst [vmem:[%s8 + $0x18] sm:$0xff] %v587
    // Predicated region
    $region42: #{forward.1} parent=1 // pred_check
      _
    $region43: #{forward.1} parent=1 // pred_check_branch
      %594 = sbr.rel (0) target = $region45
    $region44: #{forward.1} parent=1 // pred_region
      _
    $region45: #{forward.1} parent=1 // pred_fallthru
      _
    // Predicated region
    $region46: #{forward.1} parent=1 // pred_check
      _
    $region47: #{forward.1} parent=1 // pred_check_branch
      %596 = sbr.rel (0) target = $region49
    $region48: #{forward.1} parent=1 // pred_region
      _
    $region49: #{forward.1} parent=1 // pred_fallthru
      _
    %597 = vsyncpa [#allocation3], 1
    %598 = vsyncpa [#allocation5], 1

</llo_original>
